<compile_context>
chip_gen: v5e
topology: v5e:2x2
jax: 0.10.0
libtpu: 0.0.40
codegen_flags: <defaults>
</compile_context>

<pallas_src>
import functools

import jax
import jax.numpy as jnp
from jax import lax
from jax.experimental import pallas as pl
from jax.experimental.pallas import tpu as pltpu

BN_EPS = 1e-5
LANE = 128
SUBLANE = 8


def _round_up(x, m):
    return (x + m - 1) // m * m


# ---------------------------------------------------------------------------
# Phase 1: ReLU -> conv matmul -> per-tile per-channel partial stats.
# ---------------------------------------------------------------------------
def _conv_stats_kernel(p_ref, w_ref, y_ref, sum_ref, ssq_ref):
    # ReLU on the gathered patches (zero padding commutes with ReLU).
    p = jnp.maximum(p_ref[...], 0)
    # Conv as matmul on the MXU; f32 accumulation regardless of operand dtype.
    y = jnp.dot(p, w_ref[...], preferred_element_type=jnp.float32)  # (tm, Cp)
    y_ref[...] = y

    # Per-channel partial sums computed on the MXU (ones @ y) instead of a
    # cross-sublane XLU reduction. 8 identical rows keep the layout friendly.
    ones = jnp.ones((SUBLANE, y.shape[0]), jnp.float32)
    col_sum = jnp.dot(ones, y, preferred_element_type=jnp.float32)       # (8, Cp)
    col_ssq = jnp.dot(ones, y * y, preferred_element_type=jnp.float32)   # (8, Cp)
    sum_ref[0] = col_sum[0:1]
    ssq_ref[0] = col_ssq[0:1]


# ---------------------------------------------------------------------------
# Phase 2: normalize + affine, folded into one FMA per element.
# ---------------------------------------------------------------------------
def _bn_apply_kernel(y_ref, scale_ref, shift_ref, o_ref):
    o_ref[...] = (y_ref[...] * scale_ref[...] + shift_ref[...]).astype(o_ref.dtype)


def _im2col(x_nchw, kernel_size, stride, padding):
    """Extract conv patches. Returns (M, K) with K flattened as (Cin, KH, KW)."""
    n, cin, h, w = x_nchw.shape
    kh = kw = kernel_size
    xp = jnp.pad(x_nchw, ((0, 0), (0, 0), (padding, padding), (padding, padding)))
    oh = (h + 2 * padding - kh) // stride + 1
    ow = (w + 2 * padding - kw) // stride + 1
    rows = []
    for i in range(kh):
        for j in range(kw):
            rows.append(xp[:, :, i: i + oh * stride: stride,
                               j: j + ow * stride: stride])  # (N, Cin, OH, OW)
    pat = jnp.stack(rows, axis=0)                      # (KH*KW, N, Cin, OH, OW)
    pat = jnp.transpose(pat, (1, 3, 4, 2, 0))          # (N, OH, OW, Cin, KH*KW)
    pat = pat.reshape(n, oh, ow, cin * kh * kw)
    return pat.reshape(n * oh * ow, cin * kh * kw), oh, ow


@functools.partial(
    jax.jit,
    static_argnames=("kernel_size", "stride", "padding", "block_m", "matmul_dtype"))
def std_conv(x_nchw, weight_oihw, gamma, beta, *, kernel_size, stride, padding,
             block_m=512, matmul_dtype=jnp.float32):
    """ReLU -> Conv2d(bias=False) -> BatchNorm2d(affine), PyTorch NCHW semantics."""
    n, cin, h, w = x_nchw.shape
    cout = weight_oihw.shape[0]
    kh = kw = kernel_size

    patches, oh, ow = _im2col(x_nchw, kernel_size, stride, padding)  # (M, K)
    m_true = n * oh * ow
    k_dim = cin * kh * kw

    cout_p = _round_up(cout, LANE)                 # lane-dense output stores
    tm = min(_round_up(block_m, SUBLANE), _round_up(m_true, SUBLANE))
    m_pad = _round_up(m_true, tm)
    num_tiles = m_pad // tm

    # Zero-pad M (zero rows contribute exactly 0 to sum/sumsq when dividing by
    # the true M) and Cout (zero weight columns -> all-zero channels, sliced
    # off at the end).
    patches = jnp.pad(patches, ((0, m_pad - m_true), (0, 0))).astype(matmul_dtype)
    wmat = weight_oihw.reshape(cout, k_dim).T                        # (K, Cout)
    wmat = jnp.pad(wmat, ((0, 0), (0, cout_p - cout))).astype(matmul_dtype)

    y_flat, psum, pssq = pl.pallas_call(
        _conv_stats_kernel,
        grid=(num_tiles,),
        in_specs=[
            pl.BlockSpec((tm, k_dim), lambda i: (i, 0)),
            pl.BlockSpec((k_dim, cout_p), lambda i: (0, 0)),
        ],
        out_specs=[
            pl.BlockSpec((tm, cout_p), lambda i: (i, 0)),
            pl.BlockSpec((1, 1, cout_p), lambda i: (i, 0, 0)),
            pl.BlockSpec((1, 1, cout_p), lambda i: (i, 0, 0)),
        ],
        out_shape=[
            jax.ShapeDtypeStruct((m_pad, cout_p), jnp.float32),
            jax.ShapeDtypeStruct((num_tiles, 1, cout_p), jnp.float32),
            jax.ShapeDtypeStruct((num_tiles, 1, cout_p), jnp.float32),
        ],
        compiler_params=pltpu.CompilerParams(
            dimension_semantics=("parallel",)),
    )(patches, wmat)

    # Finalize BN statistics (tiny per-channel math, combines per-tile /
    # per-core partials) and fold the affine into scale/shift.
    inv_m = 1.0 / m_true
    mean = jnp.sum(psum, axis=0) * inv_m                              # (1, Cp)
    var = jnp.maximum(jnp.sum(pssq, axis=0) * inv_m - mean * mean, 0.0)
    inv = lax.rsqrt(var + BN_EPS)
    g = jnp.pad(gamma.astype(jnp.float32), (0, cout_p - cout)).reshape(1, cout_p)
    b = jnp.pad(beta.astype(jnp.float32), (0, cout_p - cout)).reshape(1, cout_p)
    scale = g * inv
    shift = b - mean * scale

    out_flat = pl.pallas_call(
        _bn_apply_kernel,
        grid=(num_tiles,),
        in_specs=[
            pl.BlockSpec((tm, cout_p), lambda i: (i, 0)),
            pl.BlockSpec((1, cout_p), lambda i: (0, 0)),
            pl.BlockSpec((1, cout_p), lambda i: (0, 0)),
        ],
        out_specs=pl.BlockSpec((tm, cout_p), lambda i: (i, 0)),
        out_shape=jax.ShapeDtypeStruct((m_pad, cout_p), x_nchw.dtype),
        compiler_params=pltpu.CompilerParams(
            dimension_semantics=("parallel",)),
    )(y_flat, scale, shift)

    # (M, Cp) -> slice true rows/channels -> (N, OH, OW, Cout) -> NCHW.
    out = out_flat[:m_true, :cout].reshape(n, oh, ow, cout)
    return jnp.transpose(out, (0, 3, 1, 2))


def _reference(x, w, gamma, beta, stride, padding):
    """Pure-JAX reference: relu -> conv -> batchnorm (training batch stats)."""
    xr = jnp.maximum(x, 0.0)
    y = lax.conv_general_dilated(
        xr, w, window_strides=(stride, stride),
        padding=((padding, padding), (padding, padding)),
        dimension_numbers=("NCHW", "OIHW", "NCHW"),
    )
    mean = jnp.mean(y, axis=(0, 2, 3), keepdims=True)
    var = jnp.mean((y - mean) ** 2, axis=(0, 2, 3), keepdims=True)
    yn = (y - mean) * lax.rsqrt(var + BN_EPS)
    return yn * gamma.reshape(1, -1, 1, 1) + beta.reshape(1, -1, 1, 1)


if __name__ == "__main__":
    key = jax.random.PRNGKey(0)
    k_x, k_w, k_g, k_b = jax.random.split(key, 4)

    # StdConv(in_channels=4, out_channels=8, kernel_size=3, stride=1, padding=1)
    N, Cin, H, W = 2, 4, 16, 16
    Cout, KS, STRIDE, PAD = 8, 3, 1, 1

    x = jax.random.normal(k_x, (N, Cin, H, W), dtype=jnp.float32)
    weight = jax.random.normal(k_w, (Cout, Cin, KS, KS), dtype=jnp.float32) * 0.1
    gamma = 1.0 + 0.1 * jax.random.normal(k_g, (Cout,), dtype=jnp.float32)
    beta = 0.1 * jax.random.normal(k_b, (Cout,), dtype=jnp.float32)

    ref = _reference(x, weight, gamma, beta, STRIDE, PAD)

    # f32 path with small M tiles (exercises multi-tile grid + cross-tile
    # stats combination).
    out = std_conv(x, weight, gamma, beta, kernel_size=KS, stride=STRIDE,
                   padding=PAD, block_m=128)
    out = jax.block_until_ready(out)
    assert out.shape == (N, Cout, H, W), out.shape
    err = float(jnp.max(jnp.abs(out - ref)))
    assert jnp.allclose(out, ref, atol=2e-4, rtol=2e-4), err

    # bf16-operand path (f32 MXU accumulation, f32 BN math) — looser check
    # consistent with bf16 operand rounding.
    out_bf16 = std_conv(x, weight, gamma, beta, kernel_size=KS, stride=STRIDE,
                        padding=PAD, matmul_dtype=jnp.bfloat16)
    out_bf16 = jax.block_until_ready(out_bf16)
    err_bf16 = float(jnp.max(jnp.abs(out_bf16 - ref)))
    assert jnp.allclose(out_bf16, ref, atol=5e-2, rtol=5e-2), err_bf16

    print("KERNEL_OK")
</pallas_src>

<mosaic_0001>
module attributes {stable_mosaic.version = 11 : i64} {
  func.func @_conv_stats_kernel(%arg0: i32, %arg1: memref<128x36xf32, #tpu.memory_space<vmem>>, %arg2: memref<36x128xf32, #tpu.memory_space<vmem>>, %arg3: memref<128x128xf32, #tpu.memory_space<vmem>>, %arg4: memref<1x1x128xf32, #tpu.memory_space<vmem>>, %arg5: memref<1x1x128xf32, #tpu.memory_space<vmem>>) attributes {dimension_semantics = [#tpu.dimension_semantics<parallel>], iteration_bounds = array<i64: 4>, scalar_prefetch = 0 : i64, scratch_operands = 0 : i64, tpu.core_type = #tpu.core_type<tc>, window_params = [{transform_indices = @transform_0, window_bounds = array<i64: 128, 36>}, {pipeline_mode = #tpu.pipeline_mode<synchronous>, transform_indices = @transform_1, window_bounds = array<i64: 36, 128>}, {transform_indices = @transform_2, window_bounds = array<i64: 128, 128>}, {transform_indices = @transform_3, window_bounds = array<i64: 1, 1, 128>}, {transform_indices = @transform_4, window_bounds = array<i64: 1, 1, 128>}]} {
    %c0 = arith.constant 0 : index
    %c0_0 = arith.constant 0 : index
    %0 = vector.load %arg1[%c0, %c0_0] : memref<128x36xf32, #tpu.memory_space<vmem>>, vector<128x36xf32>
    %cst = arith.constant 0.000000e+00 : f32
    %1 = vector.broadcast %cst : f32 to vector<128x36xf32>
    %2 = arith.maximumf %0, %1 : vector<128x36xf32>
    %c0_1 = arith.constant 0 : index
    %c0_2 = arith.constant 0 : index
    %3 = vector.load %arg2[%c0_1, %c0_2] : memref<36x128xf32, #tpu.memory_space<vmem>>, vector<36x128xf32>
    %cst_3 = arith.constant dense<0.000000e+00> : vector<128x128xf32>
    %4 = tpu.matmul %2, %3, %cst_3 {dimension_numbers = #tpu.dot_dimension_numbers<[1], [0], [0], [1], [0, 0, 1, 1], [], []>} : vector<128x36xf32>, vector<36x128xf32>, vector<128x128xf32> -> vector<128x128xf32>
    %c0_4 = arith.constant 0 : index
    %c0_5 = arith.constant 0 : index
    %5 = vector.load %arg3[%c0_4, %c0_5] : memref<128x128xf32, #tpu.memory_space<vmem>>, vector<128x128xf32>
    tpu.vector_store %arg3[%c0_4, %c0_5], %4 {strides = array<i32>} : memref<128x128xf32, #tpu.memory_space<vmem>>, vector<128x128xf32>,
    %cst_6 = arith.constant 1.000000e+00 : f32
    %6 = vector.broadcast %cst_6 : f32 to vector<8x128xf32>
    %cst_7 = arith.constant dense<0.000000e+00> : vector<8x128xf32>
    %7 = tpu.matmul %6, %4, %cst_7 {dimension_numbers = #tpu.dot_dimension_numbers<[1], [0], [0], [1], [0, 0, 1, 1], [], []>} : vector<8x128xf32>, vector<128x128xf32>, vector<8x128xf32> -> vector<8x128xf32>
    %8 = arith.mulf %4, %4 : vector<128x128xf32>
    %cst_8 = arith.constant dense<0.000000e+00> : vector<8x128xf32>
    %9 = tpu.matmul %6, %8, %cst_8 {dimension_numbers = #tpu.dot_dimension_numbers<[1], [0], [0], [1], [0, 0, 1, 1], [], []>} : vector<8x128xf32>, vector<128x128xf32>, vector<8x128xf32> -> vector<8x128xf32>
    %10 = vector.extract_strided_slice %7 {offsets = [0, 0], sizes = [1, 128], strides = [1, 1]} : vector<8x128xf32> to vector<1x128xf32>
    %c0_9 = arith.constant 0 : index
    %c0_10 = arith.constant 0 : index
    %c0_11 = arith.constant 0 : index
    %11 = vector.load %arg4[%c0_9, %c0_10, %c0_11] : memref<1x1x128xf32, #tpu.memory_space<vmem>>, vector<1x1x128xf32>
    %12 = vector.shape_cast %11 : vector<1x1x128xf32> to vector<1x128xf32>
    %13 = vector.shape_cast %10 : vector<1x128xf32> to vector<1x1x128xf32>
    tpu.vector_store %arg4[%c0_9, %c0_10, %c0_11], %13 {strides = array<i32>} : memref<1x1x128xf32, #tpu.memory_space<vmem>>, vector<1x1x128xf32>,
    %14 = vector.extract_strided_slice %9 {offsets = [0, 0], sizes = [1, 128], strides = [1, 1]} : vector<8x128xf32> to vector<1x128xf32>
    %c0_12 = arith.constant 0 : index
    %c0_13 = arith.constant 0 : index
    %c0_14 = arith.constant 0 : index
    %15 = vector.load %arg5[%c0_12, %c0_13, %c0_14] : memref<1x1x128xf32, #tpu.memory_space<vmem>>, vector<1x1x128xf32>
    %16 = vector.shape_cast %15 : vector<1x1x128xf32> to vector<1x128xf32>
    %17 = vector.shape_cast %14 : vector<1x128xf32> to vector<1x1x128xf32>
    tpu.vector_store %arg5[%c0_12, %c0_13, %c0_14], %17 {strides = array<i32>} : memref<1x1x128xf32, #tpu.memory_space<vmem>>, vector<1x1x128xf32>,
    return
  }
  func.func @transform_0(%arg0: i32) -> (i32, i32) {
    %c0_i32 = arith.constant 0 : i32
    %c0_i32_0 = arith.constant 0 : i32
    return %arg0, %c0_i32 : i32, i32
  }
  func.func @transform_1(%arg0: i32) -> (i32, i32) {
    %c0_i32 = arith.constant 0 : i32
    %c0_i32_0 = arith.constant 0 : i32
    %c0_i32_1 = arith.constant 0 : i32
    return %c0_i32, %c0_i32_0 : i32, i32
  }
  func.func @transform_2(%arg0: i32) -> (i32, i32) {
    %c0_i32 = arith.constant 0 : i32
    %c0_i32_0 = arith.constant 0 : i32
    return %arg0, %c0_i32 : i32, i32
  }
  func.func @transform_3(%arg0: i32) -> (i32, i32, i32) {
    %c0_i32 = arith.constant 0 : i32
    %c0_i32_0 = arith.constant 0 : i32
    %c0_i32_1 = arith.constant 0 : i32
    return %arg0, %c0_i32, %c0_i32_0 : i32, i32, i32
  }
  func.func @transform_4(%arg0: i32) -> (i32, i32, i32) {
    %c0_i32 = arith.constant 0 : i32
    %c0_i32_0 = arith.constant 0 : i32
    %c0_i32_1 = arith.constant 0 : i32
    return %arg0, %c0_i32, %c0_i32_0 : i32, i32, i32
  }
}

module attributes {stable_mosaic.version = 11 : i64} {
  func.func @_bn_apply_kernel(%arg0: i32, %arg1: memref<128x128xf32, #tpu.memory_space<vmem>>, %arg2: memref<1x128xf32, #tpu.memory_space<vmem>>, %arg3: memref<1x128xf32, #tpu.memory_space<vmem>>, %arg4: memref<128x128xf32, #tpu.memory_space<vmem>>) attributes {dimension_semantics = [#tpu.dimension_semantics<parallel>], iteration_bounds = array<i64: 4>, scalar_prefetch = 0 : i64, scratch_operands = 0 : i64, tpu.core_type = #tpu.core_type<tc>, window_params = [{transform_indices = @transform_0, window_bounds = array<i64: 128, 128>}, {pipeline_mode = #tpu.pipeline_mode<synchronous>, transform_indices = @transform_1, window_bounds = array<i64: 1, 128>}, {pipeline_mode = #tpu.pipeline_mode<synchronous>, transform_indices = @transform_2, window_bounds = array<i64: 1, 128>}, {transform_indices = @transform_3, window_bounds = array<i64: 128, 128>}]} {
    %c0 = arith.constant 0 : index
    %c0_0 = arith.constant 0 : index
    %0 = vector.load %arg1[%c0, %c0_0] : memref<128x128xf32, #tpu.memory_space<vmem>>, vector<128x128xf32>
    %c0_1 = arith.constant 0 : index
    %c0_2 = arith.constant 0 : index
    %1 = vector.load %arg2[%c0_1, %c0_2] : memref<1x128xf32, #tpu.memory_space<vmem>>, vector<1x128xf32>
    %2 = vector.broadcast %1 : vector<1x128xf32> to vector<128x128xf32>
    %3 = arith.mulf %0, %2 : vector<128x128xf32>
    %c0_3 = arith.constant 0 : index
    %c0_4 = arith.constant 0 : index
    %4 = vector.load %arg3[%c0_3, %c0_4] : memref<1x128xf32, #tpu.memory_space<vmem>>, vector<1x128xf32>
    %5 = vector.broadcast %4 : vector<1x128xf32> to vector<128x128xf32>
    %6 = arith.addf %3, %5 : vector<128x128xf32>
    %c0_5 = arith.constant 0 : index
    %c0_6 = arith.constant 0 : index
    %7 = vector.load %arg4[%c0_5, %c0_6] : memref<128x128xf32, #tpu.memory_space<vmem>>, vector<128x128xf32>
    tpu.vector_store %arg4[%c0_5, %c0_6], %6 {strides = array<i32>} : memref<128x128xf32, #tpu.memory_space<vmem>>, vector<128x128xf32>,
    return
  }
  func.func @transform_0(%arg0: i32) -> (i32, i32) {
    %c0_i32 = arith.constant 0 : i32
    %c0_i32_0 = arith.constant 0 : i32
    return %arg0, %c0_i32 : i32, i32
  }
  func.func @transform_1(%arg0: i32) -> (i32, i32) {
    %c0_i32 = arith.constant 0 : i32
    %c0_i32_0 = arith.constant 0 : i32
    %c0_i32_1 = arith.constant 0 : i32
    return %c0_i32, %c0_i32_0 : i32, i32
  }
  func.func @transform_2(%arg0: i32) -> (i32, i32) {
    %c0_i32 = arith.constant 0 : i32
    %c0_i32_0 = arith.constant 0 : i32
    %c0_i32_1 = arith.constant 0 : i32
    return %c0_i32, %c0_i32_0 : i32, i32
  }
  func.func @transform_3(%arg0: i32) -> (i32, i32) {
    %c0_i32 = arith.constant 0 : i32
    %c0_i32_0 = arith.constant 0 : i32
    return %arg0, %c0_i32 : i32, i32
  }
}

</mosaic_0001>

<llo_original>
// kernel: std_conv.3
$region0: #{std_conv.3}
  #allocation0 [shape = 'u32[]', space=smem, size = 0x4, offset = 0x4, fixed_abs, tag = 'smem constant byte address 0x4 - core index']
  #allocation1 [shape = 'u32[72,128]{1,0:T(1,128)}', space=vmem, size = 0x9000, scoped, tag = 'internal scratch']
  %s0 = inlined_call_operand.vmem [shape: f32[512,128], index: 0, kind: input, shape index: {}]
  %s1 = inlined_call_operand.vmem [shape: f32[1,128], index: 1, kind: input, shape index: {}]
  %s2 = inlined_call_operand.vmem [shape: f32[1,128], index: 2, kind: input, shape index: {}]
  %s3 = inlined_call_operand.vmem [shape: f32[512,128], index: 3, kind: output, shape index: {}]
  %s4 = sld [smem:[#allocation0]]
  $region45: #{std_conv.3} parent=0
    _
  %s6 = ssub.s32 1, %s4
  %s7 = scalar_select 0, %s6, %s4
  loop: start=0, step=1, limit=6
  $region2: #{std_conv.3} parent=0 // loop_pre_header
    _
  $region3: #{std_conv.3} parent=0 // loop_header
    %s9 = sphi 0, %s13
    %p10 = scmp.ge.s32.totalorder %s9, 6
    %s19 = sphi 0, %s21
    %s22 = sphi 0, %s19
    %s23 = sphi 0, %s22
    %s39 = sphi 0, %s23
    %s43 = sphi 0, %s43
    %s45 = sphi 0, %s43
    %s46 = sphi 0, %s45
    %s60 = sphi 0, %s46
    %s64 = sphi 0, %s64
    %s66 = sphi 0, %s64
    %s67 = sphi 0, %s66
    %s81 = sphi 0, %s67
    %s87 = sphi 0, %s89
    %s90 = sphi 0, %s87
    %s91 = sphi 0, %s90
    %s107 = sphi 0, %s91
  $region4: #{std_conv.3} parent=0 // loop_header_branch
    %12 = sbr.rel (%p10) target = $region8
  $region5: #{std_conv.3} parent=0 // loop_body
    %s14 = ssub.s32 %s9, 1
    %s15 = ssub.s32 %s9, 2
    %s16 = sadd.s32 %s9, 1
    %s17 = ssub.s32 %s9, %s16
    %p18 = scmp.eq.s32.totalorder %s17, 0
    %s20 = sadd.s32 %s19, 1
    %s21 = scalar_select %p18, %s19, %s20
    %p24 = pneg %p18
    %p25 = scmp.eq.s32.totalorder %s9, 3
    %p26 = por %p24, %p25
    %p27 = scmp.ne.s32.totalorder %s19, %s22
    %p28 = scmp.eq.s32.totalorder %s9, 0
    %p29 = por %p27, %p28
    %p30 = scmp.ne.s32.totalorder %s19, %s22
    %p31 = scmp.eq.s32.totalorder %s14, 3
    %p32 = por %p30, %p31
    %p33 = scmp.ne.s32.totalorder %s22, %s23
    %p34 = scmp.eq.s32.totalorder %s14, 0
    %p35 = por %p33, %p34
    %p36 = scmp.ne.s32.totalorder %s22, %s23
    %p37 = scmp.eq.s32.totalorder %s15, 3
    %p38 = por %p36, %p37
    %p40 = scmp.ne.s32.totalorder %s23, %s39
    %p41 = scmp.eq.s32.totalorder %s15, 0
    %p42 = por %p40, %p41
    %s44 = sadd.s32 %s43, 1
    %p47 = scmp.eq.s32.totalorder %s9, 3
    %p48 = scmp.ne.s32.totalorder %s43, %s45
    %p49 = scmp.eq.s32.totalorder %s9, 0
    %p50 = por %p48, %p49
    %p51 = scmp.ne.s32.totalorder %s43, %s45
    %p52 = scmp.eq.s32.totalorder %s14, 3
    %p53 = por %p51, %p52
    %p54 = scmp.ne.s32.totalorder %s45, %s46
    %p55 = scmp.eq.s32.totalorder %s14, 0
    %p56 = por %p54, %p55
    %p57 = scmp.ne.s32.totalorder %s45, %s46
    %p58 = scmp.eq.s32.totalorder %s15, 3
    %p59 = por %p57, %p58
    %p61 = scmp.ne.s32.totalorder %s46, %s60
    %p62 = scmp.eq.s32.totalorder %s15, 0
    %p63 = por %p61, %p62
    %s65 = sadd.s32 %s64, 1
    %p68 = scmp.eq.s32.totalorder %s9, 3
    %p69 = scmp.ne.s32.totalorder %s64, %s66
    %p70 = scmp.eq.s32.totalorder %s9, 0
    %p71 = por %p69, %p70
    %p72 = scmp.ne.s32.totalorder %s64, %s66
    %p73 = scmp.eq.s32.totalorder %s14, 3
    %p74 = por %p72, %p73
    %p75 = scmp.ne.s32.totalorder %s66, %s67
    %p76 = scmp.eq.s32.totalorder %s14, 0
    %p77 = por %p75, %p76
    %p78 = scmp.ne.s32.totalorder %s66, %s67
    %p79 = scmp.eq.s32.totalorder %s15, 3
    %p80 = por %p78, %p79
    %p82 = scmp.ne.s32.totalorder %s67, %s81
    %p83 = scmp.eq.s32.totalorder %s15, 0
    %p84 = por %p82, %p83
    %s85 = ssub.s32 %s9, %s16
    %p86 = scmp.eq.s32.totalorder %s85, 0
    %s88 = sadd.s32 %s87, 1
    %s89 = scalar_select %p86, %s87, %s88
    %p92 = pneg %p86
    %p93 = scmp.eq.s32.totalorder %s9, 3
    %p94 = por %p92, %p93
    %p95 = scmp.ne.s32.totalorder %s87, %s90
    %p96 = scmp.eq.s32.totalorder %s9, 0
    %p97 = por %p95, %p96
    %p98 = scmp.ne.s32.totalorder %s87, %s90
    %p99 = scmp.eq.s32.totalorder %s14, 3
    %p100 = por %p98, %p99
    %p101 = scmp.ne.s32.totalorder %s90, %s91
    %p102 = scmp.eq.s32.totalorder %s14, 0
    %p103 = por %p101, %p102
    %p104 = scmp.ne.s32.totalorder %s90, %s91
    %p105 = scmp.eq.s32.totalorder %s15, 3
    %p106 = por %p104, %p105
    %p108 = scmp.ne.s32.totalorder %s91, %s107
    %p109 = scmp.eq.s32.totalorder %s15, 0
    %p110 = por %p108, %p109
    %p111 = scmp.le.s32.totalorder 1, %s9
    %p112 = scmp.lt.s32.totalorder %s9, 5
    %p113 = pnand %p111, %p112
    %p114 = pneg %p113
    // Predicated region
    $region9: #{std_conv.3} parent=5 // pred_check
      _
    $region10: #{std_conv.3} parent=5 // pred_check_branch
      %116 = sbr.rel (%p113) target = $region12
    $region11: #{std_conv.3} parent=5 // pred_region
      %s117 = ssub.s32 %s9, 1
      // Predicated region
      $region13: #{std_conv.3} parent=11 // pred_check
        %p118 = pneg %p56
      $region14: #{std_conv.3} parent=11 // pred_check_branch
        %120 = sbr.rel (%p118) target = $region16
      $region15: #{std_conv.3} parent=11 // pred_region
        _
      $region16: #{std_conv.3} parent=11 // pred_fallthru
        _
      // Predicated region
      $region17: #{std_conv.3} parent=11 // pred_check
        %p121 = pneg %p77
      $region18: #{std_conv.3} parent=11 // pred_check_branch
        %123 = sbr.rel (%p121) target = $region20
      $region19: #{std_conv.3} parent=11 // pred_region
        _
      $region20: #{std_conv.3} parent=11 // pred_fallthru
        _
    $region12: #{std_conv.3} parent=5 // pred_fallthru
      _
    %p124 = scmp.lt.s32.totalorder %s9, 4
    // Predicated region
    $region21: #{std_conv.3} parent=5 // pred_check
      %p125 = pneg %p124
    $region22: #{std_conv.3} parent=5 // pred_check_branch
      %127 = sbr.rel (%p125) target = $region24
    $region23: #{std_conv.3} parent=5 // pred_region
      // Predicated region
      $region25: #{std_conv.3} parent=23 // pred_check
        %p128 = pneg %p29
      $region26: #{std_conv.3} parent=23 // pred_check_branch
        %130 = sbr.rel (%p128) target = $region28
      $region27: #{std_conv.3} parent=23 // pred_region
        %s131 = smul.u32 16, %s9
        %p132 = scmp.lt.s32.totalorder %s131, 63
        %s133 = scalar_select %p132, %s131, 63
        %s134 = smul.addr %s133, 8
        %s135 = scalar_lea.vmem %s0, %s134
        %s136 = smul.u32 16, %s9
      $region28: #{std_conv.3} parent=23 // pred_fallthru
        _
    $region24: #{std_conv.3} parent=5 // pred_fallthru
      _
    %p137 = scmp.le.s32.totalorder 1, %s9
    %p138 = scmp.lt.s32.totalorder %s9, 5
    %p139 = pnand %p137, %p138
    %p140 = pneg %p139
    // Predicated region
    $region29: #{std_conv.3} parent=5 // pred_check
      _
    $region30: #{std_conv.3} parent=5 // pred_check_branch
      %142 = sbr.rel (%p139) target = $region32
    $region31: #{std_conv.3} parent=5 // pred_region
      %s143 = ssub.s32 %s9, 1
      %s144 = smul.u32 16, %s14
      %p145 = scmp.lt.s32.totalorder %s144, 63
      %s146 = scalar_select %p145, %s144, 63
      %s147 = smul.addr %s146, 8
      %s148 = scalar_lea.vmem %s0, %s147
      %p149 = pneg %p35
      %p150 = pneg %p32
      %p151 = pneg %p56
      %p152 = pneg %p53
      %p153 = pneg %p77
      %p154 = pneg %p74
      %p155 = pneg %p103
      %p156 = pneg %p100
      %s157 = smul.u32 16, %s14
      %p158 = scmp.lt.s32.totalorder %s157, 63
      %s159 = scalar_select %p158, %s157, 63
      %s160 = smul.addr %s159, 8
      %s161 = scalar_lea.vmem %s3, %s160
      %s162 = smul.u32 16, %s14
      %p163 = scmp.lt.s32.totalorder %s162, 63
      %s164 = scalar_select %p163, %s162, 63
      %s165 = smul.addr %s164, 8
      %s166 = scalar_lea.vmem %s0, %s165
      %s167 = smul.u32 16, %s14
      %s168 = smul.u32 16, %s14
      %p169 = scmp.lt.s32.totalorder %s168, 63
      %s170 = scalar_select %p169, %s168, 63
      %s171 = smul.addr %s170, 8
      %s172 = scalar_lea.vmem %s3, %s171
      %s173 = smul.u32 16, %s14
      %v174 = vld [vmem:[%s166] sm:$0xff]
      %v175 = vld [vmem:[%s166 + $0x8] sm:$0xff]
      %v176 = vld [vmem:[%s166 + $0x10] sm:$0xff]
      %v177 = vld [vmem:[%s166 + $0x18] sm:$0xff]
      %v178 = vld [vmem:[%s166 + $0x20] sm:$0xff]
      %v179 = vld [vmem:[%s166 + $0x28] sm:$0xff]
      %v180 = vld [vmem:[%s166 + $0x30] sm:$0xff]
      %v181 = vld [vmem:[%s166 + $0x38] sm:$0xff]
      %v182 = vld [vmem:[%s166 + $0x40] sm:$0xff]
      %v183 = vld [vmem:[%s166 + $0x48] sm:$0xff]
      %v184 = vld [vmem:[%s166 + $0x50] sm:$0xff]
      %v185 = vld [vmem:[%s166 + $0x58] sm:$0xff]
      %v186 = vld [vmem:[%s166 + $0x60] sm:$0xff]
      %v187 = vld [vmem:[%s166 + $0x68] sm:$0xff]
      %v188 = vld [vmem:[%s166 + $0x70] sm:$0xff]
      %v189 = vld [vmem:[%s166 + $0x78] sm:$0xff]
      %v190 = vld [vmem:[%s1] sm:$0x1]
      %v192 = vperm.slane %v190, 0
      %v194 = vmul.f32 %v174, %v192
      %v195 = vmul.f32 %v175, %v192
      %v196 = vmul.f32 %v176, %v192
      %v197 = vmul.f32 %v177, %v192
      %v198 = vmul.f32 %v178, %v192
      %v199 = vmul.f32 %v179, %v192
      %v200 = vmul.f32 %v180, %v192
      %v201 = vmul.f32 %v181, %v192
      %v202 = vmul.f32 %v182, %v192
      %v203 = vmul.f32 %v183, %v192
      %v204 = vmul.f32 %v184, %v192
      %v205 = vmul.f32 %v185, %v192
      %v206 = vmul.f32 %v186, %v192
      %v207 = vmul.f32 %v187, %v192
      %v208 = vmul.f32 %v188, %v192
      %v209 = vmul.f32 %v189, %v192
      %v210 = vld [vmem:[%s2] sm:$0x1]
      %v212 = vperm.slane %v210, 0
      %v214 = vadd.f32 %v194, %v212
      %v215 = vadd.f32 %v195, %v212
      %v216 = vadd.f32 %v196, %v212
      %v217 = vadd.f32 %v197, %v212
      %v218 = vadd.f32 %v198, %v212
      %v219 = vadd.f32 %v199, %v212
      %v220 = vadd.f32 %v200, %v212
      %v221 = vadd.f32 %v201, %v212
      %v222 = vadd.f32 %v202, %v212
      %v223 = vadd.f32 %v203, %v212
      %v224 = vadd.f32 %v204, %v212
      %v225 = vadd.f32 %v205, %v212
      %v226 = vadd.f32 %v206, %v212
      %v227 = vadd.f32 %v207, %v212
      %v228 = vadd.f32 %v208, %v212
      %v229 = vadd.f32 %v209, %v212
      %230 = vst [vmem:[%s172] sm:$0xff] %v214
      %231 = vst [vmem:[%s172 + $0x8] sm:$0xff] %v215
      %232 = vst [vmem:[%s172 + $0x10] sm:$0xff] %v216
      %233 = vst [vmem:[%s172 + $0x18] sm:$0xff] %v217
      %234 = vst [vmem:[%s172 + $0x20] sm:$0xff] %v218
      %235 = vst [vmem:[%s172 + $0x28] sm:$0xff] %v219
      %236 = vst [vmem:[%s172 + $0x30] sm:$0xff] %v220
      %237 = vst [vmem:[%s172 + $0x38] sm:$0xff] %v221
      %238 = vst [vmem:[%s172 + $0x40] sm:$0xff] %v222
      %239 = vst [vmem:[%s172 + $0x48] sm:$0xff] %v223
      %240 = vst [vmem:[%s172 + $0x50] sm:$0xff] %v224
      %241 = vst [vmem:[%s172 + $0x58] sm:$0xff] %v225
      %242 = vst [vmem:[%s172 + $0x60] sm:$0xff] %v226
      %243 = vst [vmem:[%s172 + $0x68] sm:$0xff] %v227
      %244 = vst [vmem:[%s172 + $0x70] sm:$0xff] %v228
      %245 = vst [vmem:[%s172 + $0x78] sm:$0xff] %v229
      %s246 = smul.u32 16, %s14
      %p247 = scmp.lt.s32.totalorder %s246, 63
      %s248 = scalar_select %p247, %s246, 63
      %s249 = smul.addr %s248, 8
      %s250 = scalar_lea.vmem %s3, %s249
      // Predicated region
      $region33: #{std_conv.3} parent=31 // pred_check
        %p251 = pneg %p100
      $region34: #{std_conv.3} parent=31 // pred_check_branch
        %253 = sbr.rel (%p251) target = $region36
      $region35: #{std_conv.3} parent=31 // pred_region
        %s254 = smul.u32 16, %s14
      $region36: #{std_conv.3} parent=31 // pred_fallthru
        _
    $region32: #{std_conv.3} parent=5 // pred_fallthru
      _
    %p255 = scmp.le.s32.totalorder 2, %s9
    // Predicated region
    $region37: #{std_conv.3} parent=5 // pred_check
      %p256 = pneg %p255
    $region38: #{std_conv.3} parent=5 // pred_check_branch
      %258 = sbr.rel (%p256) target = $region40
    $region39: #{std_conv.3} parent=5 // pred_region
      %s259 = ssub.s32 %s9, 2
      // Predicated region
      $region41: #{std_conv.3} parent=39 // pred_check
        %p260 = pneg %p106
      $region42: #{std_conv.3} parent=39 // pred_check_branch
        %262 = sbr.rel (%p260) target = $region44
      $region43: #{std_conv.3} parent=39 // pred_region
        %s263 = smul.u32 16, %s15
        %p264 = scmp.lt.s32.totalorder %s263, 63
        %s265 = scalar_select %p264, %s263, 63
        %s266 = smul.addr %s265, 8
        %s267 = scalar_lea.vmem %s3, %s266
      $region44: #{std_conv.3} parent=39 // pred_fallthru
        _
    $region40: #{std_conv.3} parent=5 // pred_fallthru
      _
  $region6: #{std_conv.3} parent=0 // loop_footer
    %s13 = sadd.s32 1, %s9
  $region7: #{std_conv.3} parent=0 // loop_footer_branch
    %8 = sbr.rel target = $region3
  $region8: #{std_conv.3} parent=0 // loop_exit
    _

// kernel: std_conv.2
$region0: #{std_conv.2}
  #allocation0 [shape = 'u32[]', space=smem, size = 0x4, offset = 0x4, fixed_abs, tag = 'smem constant byte address 0x4 - core index']
  #allocation1 [shape = 'u32[72,128]{1,0:T(1,128)}', space=vmem, size = 0x9000, scoped, tag = 'internal scratch']
  %s0 = inlined_call_operand.vmem [shape: f32[512,36], index: 0, kind: input, shape index: {}]
  %s1 = inlined_call_operand.vmem [shape: f32[36,128], index: 1, kind: input, shape index: {}]
  %s2 = inlined_call_operand.vmem [shape: f32[512,128], index: 2, kind: output, shape index: {0}]
  %s3 = inlined_call_operand.vmem [shape: f32[4,1,128], index: 3, kind: output, shape index: {1}]
  %s4 = inlined_call_operand.vmem [shape: f32[4,1,128], index: 4, kind: output, shape index: {2}]
  %5 = xla_tuple %s2, %s3, %s4
  %s6 = sld [smem:[#allocation0]]
  $region57: #{std_conv.2} parent=0
    _
  %s8 = ssub.s32 1, %s6
  %s9 = scalar_select 0, %s8, %s6
  loop: start=0, step=1, limit=6
  $region2: #{std_conv.2} parent=0 // loop_pre_header
    _
  $region3: #{std_conv.2} parent=0 // loop_header
    %s11 = sphi 0, %s15
    %p12 = scmp.ge.s32.totalorder %s11, 6
    %s21 = sphi 0, %s23
    %s24 = sphi 0, %s21
    %s25 = sphi 0, %s24
    %s41 = sphi 0, %s25
    %s45 = sphi 0, %s45
    %s47 = sphi 0, %s45
    %s48 = sphi 0, %s47
    %s62 = sphi 0, %s48
    %s68 = sphi 0, %s70
    %s71 = sphi 0, %s68
    %s72 = sphi 0, %s71
    %s88 = sphi 0, %s72
    %s94 = sphi 0, %s96
    %s97 = sphi 0, %s94
    %s98 = sphi 0, %s97
    %s114 = sphi 0, %s98
    %s120 = sphi 0, %s122
    %s123 = sphi 0, %s120
    %s124 = sphi 0, %s123
    %s140 = sphi 0, %s124
  $region4: #{std_conv.2} parent=0 // loop_header_branch
    %14 = sbr.rel (%p12) target = $region8
  $region5: #{std_conv.2} parent=0 // loop_body
    %s16 = ssub.s32 %s11, 1
    %s17 = ssub.s32 %s11, 2
    %s18 = sadd.s32 %s11, 1
    %s19 = ssub.s32 %s11, %s18
    %p20 = scmp.eq.s32.totalorder %s19, 0
    %s22 = sadd.s32 %s21, 1
    %s23 = scalar_select %p20, %s21, %s22
    %p26 = pneg %p20
    %p27 = scmp.eq.s32.totalorder %s11, 3
    %p28 = por %p26, %p27
    %p29 = scmp.ne.s32.totalorder %s21, %s24
    %p30 = scmp.eq.s32.totalorder %s11, 0
    %p31 = por %p29, %p30
    %p32 = scmp.ne.s32.totalorder %s21, %s24
    %p33 = scmp.eq.s32.totalorder %s16, 3
    %p34 = por %p32, %p33
    %p35 = scmp.ne.s32.totalorder %s24, %s25
    %p36 = scmp.eq.s32.totalorder %s16, 0
    %p37 = por %p35, %p36
    %p38 = scmp.ne.s32.totalorder %s24, %s25
    %p39 = scmp.eq.s32.totalorder %s17, 3
    %p40 = por %p38, %p39
    %p42 = scmp.ne.s32.totalorder %s25, %s41
    %p43 = scmp.eq.s32.totalorder %s17, 0
    %p44 = por %p42, %p43
    %s46 = sadd.s32 %s45, 1
    %p49 = scmp.eq.s32.totalorder %s11, 3
    %p50 = scmp.ne.s32.totalorder %s45, %s47
    %p51 = scmp.eq.s32.totalorder %s11, 0
    %p52 = por %p50, %p51
    %p53 = scmp.ne.s32.totalorder %s45, %s47
    %p54 = scmp.eq.s32.totalorder %s16, 3
    %p55 = por %p53, %p54
    %p56 = scmp.ne.s32.totalorder %s47, %s48
    %p57 = scmp.eq.s32.totalorder %s16, 0
    %p58 = por %p56, %p57
    %p59 = scmp.ne.s32.totalorder %s47, %s48
    %p60 = scmp.eq.s32.totalorder %s17, 3
    %p61 = por %p59, %p60
    %p63 = scmp.ne.s32.totalorder %s48, %s62
    %p64 = scmp.eq.s32.totalorder %s17, 0
    %p65 = por %p63, %p64
    %s66 = ssub.s32 %s11, %s18
    %p67 = scmp.eq.s32.totalorder %s66, 0
    %s69 = sadd.s32 %s68, 1
    %s70 = scalar_select %p67, %s68, %s69
    %p73 = pneg %p67
    %p74 = scmp.eq.s32.totalorder %s11, 3
    %p75 = por %p73, %p74
    %p76 = scmp.ne.s32.totalorder %s68, %s71
    %p77 = scmp.eq.s32.totalorder %s11, 0
    %p78 = por %p76, %p77
    %p79 = scmp.ne.s32.totalorder %s68, %s71
    %p80 = scmp.eq.s32.totalorder %s16, 3
    %p81 = por %p79, %p80
    %p82 = scmp.ne.s32.totalorder %s71, %s72
    %p83 = scmp.eq.s32.totalorder %s16, 0
    %p84 = por %p82, %p83
    %p85 = scmp.ne.s32.totalorder %s71, %s72
    %p86 = scmp.eq.s32.totalorder %s17, 3
    %p87 = por %p85, %p86
    %p89 = scmp.ne.s32.totalorder %s72, %s88
    %p90 = scmp.eq.s32.totalorder %s17, 0
    %p91 = por %p89, %p90
    %s92 = ssub.s32 %s11, %s18
    %p93 = scmp.eq.s32.totalorder %s92, 0
    %s95 = sadd.s32 %s94, 1
    %s96 = scalar_select %p93, %s94, %s95
    %p99 = pneg %p93
    %p100 = scmp.eq.s32.totalorder %s11, 3
    %p101 = por %p99, %p100
    %p102 = scmp.ne.s32.totalorder %s94, %s97
    %p103 = scmp.eq.s32.totalorder %s11, 0
    %p104 = por %p102, %p103
    %p105 = scmp.ne.s32.totalorder %s94, %s97
    %p106 = scmp.eq.s32.totalorder %s16, 3
    %p107 = por %p105, %p106
    %p108 = scmp.ne.s32.totalorder %s97, %s98
    %p109 = scmp.eq.s32.totalorder %s16, 0
    %p110 = por %p108, %p109
    %p111 = scmp.ne.s32.totalorder %s97, %s98
    %p112 = scmp.eq.s32.totalorder %s17, 3
    %p113 = por %p111, %p112
    %p115 = scmp.ne.s32.totalorder %s98, %s114
    %p116 = scmp.eq.s32.totalorder %s17, 0
    %p117 = por %p115, %p116
    %s118 = ssub.s32 %s11, %s18
    %p119 = scmp.eq.s32.totalorder %s118, 0
    %s121 = sadd.s32 %s120, 1
    %s122 = scalar_select %p119, %s120, %s121
    %p125 = pneg %p119
    %p126 = scmp.eq.s32.totalorder %s11, 3
    %p127 = por %p125, %p126
    %p128 = scmp.ne.s32.totalorder %s120, %s123
    %p129 = scmp.eq.s32.totalorder %s11, 0
    %p130 = por %p128, %p129
    %p131 = scmp.ne.s32.totalorder %s120, %s123
    %p132 = scmp.eq.s32.totalorder %s16, 3
    %p133 = por %p131, %p132
    %p134 = scmp.ne.s32.totalorder %s123, %s124
    %p135 = scmp.eq.s32.totalorder %s16, 0
    %p136 = por %p134, %p135
    %p137 = scmp.ne.s32.totalorder %s123, %s124
    %p138 = scmp.eq.s32.totalorder %s17, 3
    %p139 = por %p137, %p138
    %p141 = scmp.ne.s32.totalorder %s124, %s140
    %p142 = scmp.eq.s32.totalorder %s17, 0
    %p143 = por %p141, %p142
    %p144 = scmp.le.s32.totalorder 1, %s11
    %p145 = scmp.lt.s32.totalorder %s11, 5
    %p146 = pnand %p144, %p145
    %p147 = pneg %p146
    // Predicated region
    $region9: #{std_conv.2} parent=5 // pred_check
      _
    $region10: #{std_conv.2} parent=5 // pred_check_branch
      %149 = sbr.rel (%p146) target = $region12
    $region11: #{std_conv.2} parent=5 // pred_region
      %s150 = ssub.s32 %s11, 1
      // Predicated region
      $region13: #{std_conv.2} parent=11 // pred_check
        %p151 = pneg %p58
      $region14: #{std_conv.2} parent=11 // pred_check_branch
        %153 = sbr.rel (%p151) target = $region16
      $region15: #{std_conv.2} parent=11 // pred_region
        _
      $region16: #{std_conv.2} parent=11 // pred_fallthru
        _
    $region12: #{std_conv.2} parent=5 // pred_fallthru
      _
    %p154 = scmp.lt.s32.totalorder %s11, 4
    // Predicated region
    $region17: #{std_conv.2} parent=5 // pred_check
      %p155 = pneg %p154
    $region18: #{std_conv.2} parent=5 // pred_check_branch
      %157 = sbr.rel (%p155) target = $region20
    $region19: #{std_conv.2} parent=5 // pred_region
      // Predicated region
      $region21: #{std_conv.2} parent=19 // pred_check
        %p158 = pneg %p31
      $region22: #{std_conv.2} parent=19 // pred_check_branch
        %160 = sbr.rel (%p158) target = $region24
      $region23: #{std_conv.2} parent=19 // pred_region
        %s161 = smul.u32 16, %s11
        %p162 = scmp.lt.s32.totalorder %s161, 63
        %s163 = scalar_select %p162, %s161, 63
        %s164 = smul.addr %s163, 8
        %s165 = scalar_lea.vmem %s0, %s164
        %s166 = smul.u32 16, %s11
      $region24: #{std_conv.2} parent=19 // pred_fallthru
        _
    $region20: #{std_conv.2} parent=5 // pred_fallthru
      _
    %p167 = scmp.le.s32.totalorder 1, %s11
    %p168 = scmp.lt.s32.totalorder %s11, 5
    %p169 = pnand %p167, %p168
    %p170 = pneg %p169
    // Predicated region
    $region25: #{std_conv.2} parent=5 // pred_check
      _
    $region26: #{std_conv.2} parent=5 // pred_check_branch
      %172 = sbr.rel (%p169) target = $region28
    $region27: #{std_conv.2} parent=5 // pred_region
      %s173 = ssub.s32 %s11, 1
      %s174 = smul.u32 16, %s16
      %p175 = scmp.lt.s32.totalorder %s174, 63
      %s176 = scalar_select %p175, %s174, 63
      %s177 = smul.addr %s176, 8
      %s178 = scalar_lea.vmem %s0, %s177
      %p179 = pneg %p37
      %p180 = pneg %p34
      %p181 = pneg %p58
      %p182 = pneg %p55
      %p183 = pneg %p84
      %p184 = pneg %p81
      %s185 = smul.u32 16, %s16
      %p186 = scmp.lt.s32.totalorder %s185, 63
      %s187 = scalar_select %p186, %s185, 63
      %s188 = smul.addr %s187, 8
      %s189 = scalar_lea.vmem %s2, %s188
      %p190 = pneg %p110
      %p191 = pneg %p107
      %p192 = scmp.lt.s32.totalorder %s16, 3
      %s193 = scalar_select %p192, %s16, 3
      %s194 = scalar_lea.vmem %s3, %s193
      %p195 = pneg %p136
      %p196 = pneg %p133
      %p197 = scmp.lt.s32.totalorder %s16, 3
      %s198 = scalar_select %p197, %s16, 3
      %s199 = scalar_lea.vmem %s4, %s198
      %s200 = smul.u32 16, %s16
      %p201 = scmp.lt.s32.totalorder %s200, 63
      %s202 = scalar_select %p201, %s200, 63
      %s203 = smul.addr %s202, 8
      %s204 = scalar_lea.vmem %s0, %s203
      %s205 = smul.u32 16, %s16
      %s206 = smul.u32 16, %s16
      %p207 = scmp.lt.s32.totalorder %s206, 63
      %s208 = scalar_select %p207, %s206, 63
      %s209 = smul.addr %s208, 8
      %s210 = scalar_lea.vmem %s2, %s209
      %s211 = smul.u32 16, %s16
      %p212 = scmp.lt.s32.totalorder %s16, 3
      %s213 = scalar_select %p212, %s16, 3
      %s214 = scalar_lea.vmem %s3, %s213
      %p215 = scmp.lt.s32.totalorder %s16, 3
      %s216 = scalar_select %p215, %s16, 3
      %s217 = scalar_lea.vmem %s4, %s216
      %v218 = vld [vmem:[%s204] sm:$0xff]
      %v219 = vld [vmem:[%s204 + $0x8] sm:$0xff]
      %v220 = vld [vmem:[%s204 + $0x10] sm:$0xff]
      %v221 = vld [vmem:[%s204 + $0x18] sm:$0xff]
      %v222 = vld [vmem:[%s204 + $0x20] sm:$0xff]
      %v223 = vld [vmem:[%s204 + $0x28] sm:$0xff]
      %v224 = vld [vmem:[%s204 + $0x30] sm:$0xff]
      %v225 = vld [vmem:[%s204 + $0x38] sm:$0xff]
      %v226 = vld [vmem:[%s204 + $0x40] sm:$0xff]
      %v227 = vld [vmem:[%s204 + $0x48] sm:$0xff]
      %v228 = vld [vmem:[%s204 + $0x50] sm:$0xff]
      %v229 = vld [vmem:[%s204 + $0x58] sm:$0xff]
      %v230 = vld [vmem:[%s204 + $0x60] sm:$0xff]
      %v231 = vld [vmem:[%s204 + $0x68] sm:$0xff]
      %v232 = vld [vmem:[%s204 + $0x70] sm:$0xff]
      %v233 = vld [vmem:[%s204 + $0x78] sm:$0xff]
      %v234 = vmax.f32 %v218, 0.0
      %v235 = vmax.f32 %v219, 0.0
      %v236 = vmax.f32 %v220, 0.0
      %v237 = vmax.f32 %v221, 0.0
      %v238 = vmax.f32 %v222, 0.0
      %v239 = vmax.f32 %v223, 0.0
      %v240 = vmax.f32 %v224, 0.0
      %v241 = vmax.f32 %v225, 0.0
      %v242 = vmax.f32 %v226, 0.0
      %v243 = vmax.f32 %v227, 0.0
      %v244 = vmax.f32 %v228, 0.0
      %v245 = vmax.f32 %v229, 0.0
      %v246 = vmax.f32 %v230, 0.0
      %v247 = vmax.f32 %v231, 0.0
      %v248 = vmax.f32 %v232, 0.0
      %v249 = vmax.f32 %v233, 0.0
      %v250 = vld [vmem:[%s1] sm:$0xff]
      %v251 = vld [vmem:[%s1 + $0x8] sm:$0xff]
      %v252 = vld [vmem:[%s1 + $0x10] sm:$0xff]
      %v253 = vld [vmem:[%s1 + $0x18] sm:$0xff]
      %v254 = vld [vmem:[%s1 + $0x20] sm:$0xf]
      %vm255 = vcmask 293888
      %v257 = vsel %vm255, %v234, 0
      %v260 = vsel %vm255, %v235, 0
      %v263 = vsel %vm255, %v236, 0
      %v266 = vsel %vm255, %v237, 0
      %v269 = vsel %vm255, %v238, 0
      %v272 = vsel %vm255, %v239, 0
      %v275 = vsel %vm255, %v240, 0
      %v278 = vsel %vm255, %v241, 0
      %v281 = vsel %vm255, %v242, 0
      %v284 = vsel %vm255, %v243, 0
      %v287 = vsel %vm255, %v244, 0
      %v290 = vsel %vm255, %v245, 0
      %v293 = vsel %vm255, %v246, 0
      %v296 = vsel %vm255, %v247, 0
      %v299 = vsel %vm255, %v248, 0
      %v302 = vsel %vm255, %v249, 0
      %vm304 = vcmask 1043456
      %v306 = vsel %vm304, %v254, 0
      %308 = vmatpush.msra.mxu0 0.0
      %309 = vmatpush.msra.mxu0 0.0
      %310 = vmatpush.msra.mxu0 0.0
      %311 = vmatpush.msra.mxu0 0.0
      %312 = vmatpush.msra.mxu0 0.0
      %313 = vmatpush.msra.mxu0 0.0
      %314 = vmatpush.msra.mxu0 0.0
      %315 = vmatpush.msra.mxu0 0.0
      %316 = vmatpush.msra.mxu0 0.0
      %317 = vmatpush.msra.mxu0 0.0
      %318 = vmatpush.msra.mxu0 0.0
      %319 = vmatpush.msra.mxu0 %v306
      %320 = vmatpush.msra.mxu0 %v253
      %321 = vmatpush.msra.mxu0 %v252
      %322 = vmatpush.msra.mxu0 %v251
      %323 = vmatpush.msra.mxu0 %v250
      %324 = vmatmul.f32.gmra.mxu0 %v257
      %v325 = vpop.f32.mrf.mxu0
      %v326 = vadd.f32 0.0, %v325
      %327 = vmatmul.f32.gmra.mxu0 %v260
      %v328 = vpop.f32.mrf.mxu0
      %v329 = vadd.f32 0.0, %v328
      %330 = vmatmul.f32.gmra.mxu0 %v263
      %v331 = vpop.f32.mrf.mxu0
      %v332 = vadd.f32 0.0, %v331
      %333 = vmatmul.f32.gmra.mxu0 %v266
      %v334 = vpop.f32.mrf.mxu0
      %v335 = vadd.f32 0.0, %v334
      %336 = vmatmul.f32.gmra.mxu0 %v269
      %v337 = vpop.f32.mrf.mxu0
      %v338 = vadd.f32 0.0, %v337
      %339 = vmatmul.f32.gmra.mxu0 %v272
      %v340 = vpop.f32.mrf.mxu0
      %v341 = vadd.f32 0.0, %v340
      %342 = vmatmul.f32.gmra.mxu0 %v275
      %v343 = vpop.f32.mrf.mxu0
      %v344 = vadd.f32 0.0, %v343
      %345 = vmatmul.f32.gmra.mxu0 %v278
      %v346 = vpop.f32.mrf.mxu0
      %v347 = vadd.f32 0.0, %v346
      %348 = vmatmul.f32.gmra.mxu0 %v281
      %v349 = vpop.f32.mrf.mxu0
      %v350 = vadd.f32 0.0, %v349
      %351 = vmatmul.f32.gmra.mxu0 %v284
      %v352 = vpop.f32.mrf.mxu0
      %v353 = vadd.f32 0.0, %v352
      %354 = vmatmul.f32.gmra.mxu0 %v287
      %v355 = vpop.f32.mrf.mxu0
      %v356 = vadd.f32 0.0, %v355
      %357 = vmatmul.f32.gmra.mxu0 %v290
      %v358 = vpop.f32.mrf.mxu0
      %v359 = vadd.f32 0.0, %v358
      %360 = vmatmul.f32.gmra.mxu0 %v293
      %v361 = vpop.f32.mrf.mxu0
      %v362 = vadd.f32 0.0, %v361
      %363 = vmatmul.f32.gmra.mxu0 %v296
      %v364 = vpop.f32.mrf.mxu0
      %v365 = vadd.f32 0.0, %v364
      %366 = vmatmul.f32.gmra.mxu0 %v299
      %v367 = vpop.f32.mrf.mxu0
      %v368 = vadd.f32 0.0, %v367
      %369 = vmatmul.f32.gmra.mxu0 %v302
      %v370 = vpop.f32.mrf.mxu0
      %v371 = vadd.f32 0.0, %v370
      %372 = vdwg.mxu0
      %373 = vst [vmem:[%s210] sm:$0xff] %v326
      %374 = vst [vmem:[%s210 + $0x8] sm:$0xff] %v329
      %375 = vst [vmem:[%s210 + $0x10] sm:$0xff] %v332
      %376 = vst [vmem:[%s210 + $0x18] sm:$0xff] %v335
      %377 = vst [vmem:[%s210 + $0x20] sm:$0xff] %v338
      %378 = vst [vmem:[%s210 + $0x28] sm:$0xff] %v341
      %379 = vst [vmem:[%s210 + $0x30] sm:$0xff] %v344
      %380 = vst [vmem:[%s210 + $0x38] sm:$0xff] %v347
      %381 = vst [vmem:[%s210 + $0x40] sm:$0xff] %v350
      %382 = vst [vmem:[%s210 + $0x48] sm:$0xff] %v353
      %383 = vst [vmem:[%s210 + $0x50] sm:$0xff] %v356
      %384 = vst [vmem:[%s210 + $0x58] sm:$0xff] %v359
      %385 = vst [vmem:[%s210 + $0x60] sm:$0xff] %v362
      %386 = vst [vmem:[%s210 + $0x68] sm:$0xff] %v365
      %387 = vst [vmem:[%s210 + $0x70] sm:$0xff] %v368
      %388 = vst [vmem:[%s210 + $0x78] sm:$0xff] %v371
      %389 = vmatpush.msra.mxu0 %v371
      %390 = vmatpush.msra.mxu0 %v368
      %391 = vmatpush.msra.mxu0 %v365
      %392 = vmatpush.msra.mxu0 %v362
      %393 = vmatpush.msra.mxu0 %v359
      %394 = vmatpush.msra.mxu0 %v356
      %395 = vmatpush.msra.mxu0 %v353
      %396 = vmatpush.msra.mxu0 %v350
      %397 = vmatpush.msra.mxu0 %v347
      %398 = vmatpush.msra.mxu0 %v344
      %399 = vmatpush.msra.mxu0 %v341
      %400 = vmatpush.msra.mxu0 %v338
      %401 = vmatpush.msra.mxu0 %v335
      %402 = vmatpush.msra.mxu0 %v332
      %403 = vmatpush.msra.mxu0 %v329
      %404 = vmatpush.msra.mxu0 %v326
      %405 = vmatmul.f32.gmra.mxu0 1.0
      %v406 = vpop.f32.mrf.mxu0
      %v407 = vadd.f32 0.0, %v406
      %408 = vdwg.mxu0
      %v409 = vmul.f32 %v326, %v326
      %v410 = vmul.f32 %v329, %v329
      %v411 = vmul.f32 %v332, %v332
      %v412 = vmul.f32 %v335, %v335
      %v413 = vmul.f32 %v338, %v338
      %v414 = vmul.f32 %v341, %v341
      %v415 = vmul.f32 %v344, %v344
      %v416 = vmul.f32 %v347, %v347
      %v417 = vmul.f32 %v350, %v350
      %v418 = vmul.f32 %v353, %v353
      %v419 = vmul.f32 %v356, %v356
      %v420 = vmul.f32 %v359, %v359
      %v421 = vmul.f32 %v362, %v362
      %v422 = vmul.f32 %v365, %v365
      %v423 = vmul.f32 %v368, %v368
      %v424 = vmul.f32 %v371, %v371
      %425 = vmatpush.msra.mxu0 %v424
      %426 = vmatpush.msra.mxu0 %v423
      %427 = vmatpush.msra.mxu0 %v422
      %428 = vmatpush.msra.mxu0 %v421
      %429 = vmatpush.msra.mxu0 %v420
      %430 = vmatpush.msra.mxu0 %v419
      %431 = vmatpush.msra.mxu0 %v418
      %432 = vmatpush.msra.mxu0 %v417
      %433 = vmatpush.msra.mxu0 %v416
      %434 = vmatpush.msra.mxu0 %v415
      %435 = vmatpush.msra.mxu0 %v414
      %436 = vmatpush.msra.mxu0 %v413
      %437 = vmatpush.msra.mxu0 %v412
      %438 = vmatpush.msra.mxu0 %v411
      %439 = vmatpush.msra.mxu0 %v410
      %440 = vmatpush.msra.mxu0 %v409
      %441 = vmatmul.f32.gmra.mxu0 1.0
      %v442 = vpop.f32.mrf.mxu0
      %v443 = vadd.f32 0.0, %v442
      %444 = vdwg.mxu0
      %445 = vst [vmem:[%s214] sm:$0x1] %v407
      %446 = vst [vmem:[%s217] sm:$0x1] %v443
      %s447 = smul.u32 16, %s16
      %p448 = scmp.lt.s32.totalorder %s447, 63
      %s449 = scalar_select %p448, %s447, 63
      %s450 = smul.addr %s449, 8
      %s451 = scalar_lea.vmem %s2, %s450
      %p452 = scmp.lt.s32.totalorder %s16, 3
      %s453 = scalar_select %p452, %s16, 3
      %s454 = scalar_lea.vmem %s3, %s453
      %p455 = scmp.lt.s32.totalorder %s16, 3
      %s456 = scalar_select %p455, %s16, 3
      %s457 = scalar_lea.vmem %s4, %s456
      // Predicated region
      $region29: #{std_conv.2} parent=27 // pred_check
        %p458 = pneg %p81
      $region30: #{std_conv.2} parent=27 // pred_check_branch
        %460 = sbr.rel (%p458) target = $region32
      $region31: #{std_conv.2} parent=27 // pred_region
        %s461 = smul.u32 16, %s16
      $region32: #{std_conv.2} parent=27 // pred_fallthru
        _
      // Predicated region
      $region33: #{std_conv.2} parent=27 // pred_check
        %p462 = pneg %p107
      $region34: #{std_conv.2} parent=27 // pred_check_branch
        %464 = sbr.rel (%p462) target = $region36
      $region35: #{std_conv.2} parent=27 // pred_region
        _
      $region36: #{std_conv.2} parent=27 // pred_fallthru
        _
      // Predicated region
      $region37: #{std_conv.2} parent=27 // pred_check
        %p465 = pneg %p133
      $region38: #{std_conv.2} parent=27 // pred_check_branch
        %467 = sbr.rel (%p465) target = $region40
      $region39: #{std_conv.2} parent=27 // pred_region
        _
      $region40: #{std_conv.2} parent=27 // pred_fallthru
        _
    $region28: #{std_conv.2} parent=5 // pred_fallthru
      _
    %p468 = scmp.le.s32.totalorder 2, %s11
    // Predicated region
    $region41: #{std_conv.2} parent=5 // pred_check
      %p469 = pneg %p468
    $region42: #{std_conv.2} parent=5 // pred_check_branch
      %471 = sbr.rel (%p469) target = $region44
    $region43: #{std_conv.2} parent=5 // pred_region
      %s472 = ssub.s32 %s11, 2
      // Predicated region
      $region45: #{std_conv.2} parent=43 // pred_check
        %p473 = pneg %p87
      $region46: #{std_conv.2} parent=43 // pred_check_branch
        %475 = sbr.rel (%p473) target = $region48
      $region47: #{std_conv.2} parent=43 // pred_region
        %s476 = smul.u32 16, %s17
        %p477 = scmp.lt.s32.totalorder %s476, 63
        %s478 = scalar_select %p477, %s476, 63
        %s479 = smul.addr %s478, 8
        %s480 = scalar_lea.vmem %s2, %s479
      $region48: #{std_conv.2} parent=43 // pred_fallthru
        _
      // Predicated region
      $region49: #{std_conv.2} parent=43 // pred_check
        %p481 = pneg %p113
      $region50: #{std_conv.2} parent=43 // pred_check_branch
        %483 = sbr.rel (%p481) target = $region52
      $region51: #{std_conv.2} parent=43 // pred_region
        %p484 = scmp.lt.s32.totalorder %s17, 3
        %s485 = scalar_select %p484, %s17, 3
        %s486 = scalar_lea.vmem %s3, %s485
      $region52: #{std_conv.2} parent=43 // pred_fallthru
        _
      // Predicated region
      $region53: #{std_conv.2} parent=43 // pred_check
        %p487 = pneg %p139
      $region54: #{std_conv.2} parent=43 // pred_check_branch
        %489 = sbr.rel (%p487) target = $region56
      $region55: #{std_conv.2} parent=43 // pred_region
        %p490 = scmp.lt.s32.totalorder %s17, 3
        %s491 = scalar_select %p490, %s17, 3
        %s492 = scalar_lea.vmem %s4, %s491
      $region56: #{std_conv.2} parent=43 // pred_fallthru
        _
    $region44: #{std_conv.2} parent=5 // pred_fallthru
      _
  $region6: #{std_conv.2} parent=0 // loop_footer
    %s15 = sadd.s32 1, %s11
  $region7: #{std_conv.2} parent=0 // loop_footer_branch
    %10 = sbr.rel target = $region3
  $region8: #{std_conv.2} parent=0 // loop_exit
    _

</llo_original>
